<compile_context>
chip_gen: v5e
topology: v5e:2x2
jax: 0.10.0
libtpu: 0.0.40
codegen_flags: <defaults>
</compile_context>

<pallas_src>
import functools
import math

import jax
import jax.numpy as jnp
from jax import lax
from jax.experimental import pallas as pl
from jax.experimental.pallas import tpu as pltpu

LN_EPS = 1e-5


def _proj_ln_kernel(x_ref, w_ref, b_ref, g_ref, beta_ref, o_ref,
                    *, tokens_per_block, cross_attention_dim):
    # x_ref:    (B, E)        full image embeddings (resident across steps)
    # w_ref:    (E, k*C)      weight columns for the k tokens of this step
    # b_ref:    (1, k*C)      bias columns for the k tokens of this step
    # g_ref:    (1, C)        LayerNorm gamma
    # beta_ref: (1, C)        LayerNorm beta
    # o_ref:    (B, k*C)      output columns for this step (lane-dense)
    k = tokens_per_block
    C = cross_attention_dim

    w = w_ref[...]                          # stream W in its stored dtype (bf16)
    x = x_ref[...].astype(w.dtype)          # explicit cast of the tiny activation:
                                            # keeps the MXU on the bf16 path and
                                            # prevents an in-kernel f32 upcast of
                                            # the whole (E, k*C) W tile.

    # Linear projection on the MXU with f32 accumulation; bias added before LN.
    y = jnp.dot(x, w, preferred_element_type=jnp.float32)       # (B, k*C) f32
    y = y + b_ref[...].astype(jnp.float32)

    g = g_ref[...].astype(jnp.float32)                            # (1, C)
    bt = beta_ref[...].astype(jnp.float32)                        # (1, C)

    # LayerNorm per token: static unrolled loop over the k lane-aligned C-wide
    # chunks.  Single-pass stats (sum, sum-of-squares) -> half the XLU
    # reductions of the mean/mean(centered^2) formulation.
    inv_c = 1.0 / C
    for t in range(k):
        yt = y[:, t * C:(t + 1) * C]                              # (B, C) f32
        mean = jnp.sum(yt, axis=-1, keepdims=True) * inv_c
        meansq = jnp.sum(yt * yt, axis=-1, keepdims=True) * inv_c
        var = meansq - mean * mean
        y_norm = (yt - mean) * lax.rsqrt(var + LN_EPS)
        out = y_norm * g + bt                                     # (B, C)
        o_ref[:, t * C:(t + 1) * C] = out.astype(o_ref.dtype)


def _nbytes(shape, dtype):
    return int(math.prod(shape)) * jnp.dtype(dtype).itemsize


def _physical_vmem_bytes():
    """Best-effort query of physical VMEM; conservative (v7x) fallback."""
    try:
        info = pltpu.get_tpu_info()
        return int(getattr(info, "vmem_capacity_bytes", 64 * 1024 * 1024))
    except Exception:
        return 64 * 1024 * 1024


def _pick_tokens_per_block(T, E, C, w_dtype):
    """Pick k = tokens per grid step.

    Targets ~4 MiB of weight per step (per-step overhead ~0.35 us becomes
    <10% of the DMA time on v6e/v7x), but guarantees num_blocks >= 2 (even if
    possible) when T >= 2 so v7x's two TensorCores split the weight stream.
    """
    itemsize = jnp.dtype(w_dtype).itemsize
    bytes_per_token = E * C * itemsize
    target_bytes = 4 * 1024 * 1024

    # Largest divisor of T whose per-step weight tile fits the DMA target.
    k = 1
    for k_cand in range(1, T + 1):
        if T % k_cand == 0 and k_cand * bytes_per_token <= target_bytes:
            k = k_cand

    # Never collapse to a 1-step grid when T allows a split: prefer the
    # smallest even num_blocks >= 2 (largest k), else any num_blocks >= 2.
    if T // k < 2 <= T:
        chosen = None
        for nb in range(2, T + 1):
            if T % nb == 0 and nb % 2 == 0:
                chosen = T // nb
                break
        if chosen is None:
            for nb in range(2, T + 1):
                if T % nb == 0:
                    chosen = T // nb
                    break
        if chosen is not None:
            k = chosen

    # BlockSpec lane constraint: last block dim must be a multiple of 128 or
    # the full extent.  If k*C violates it, fall back to the full-width block.
    if (k * C) % 128 != 0 and k != T:
        k = T
    return k


def image_proj_model(image_embeds, w, b, gamma, beta, *,
                     clip_extra_context_tokens, cross_attention_dim,
                     tokens_per_block=None):
    """image_embeds: (B, E); w: (E, T*C); b: (T*C,); gamma/beta: (C,).

    Returns (B, T, C), matching PyTorch ImageProjModel.forward.
    """
    B, E = image_embeds.shape
    T = clip_extra_context_tokens
    C = cross_attention_dim
    assert w.shape == (E, T * C)
    assert b.shape == (T * C,)
    assert gamma.shape == (C,)
    assert beta.shape == (C,)

    if tokens_per_block is None:
        tokens_per_block = _pick_tokens_per_block(T, E, C, w.dtype)
    k = tokens_per_block
    assert T % k == 0
    num_blocks = T // k
    # Lowering constraint for the column-blocked W / bias / output specs.
    assert (k * C) % 128 == 0 or num_blocks == 1, (
        f"tokens_per_block*cross_attention_dim ({k}*{C}) must be a multiple "
        f"of 128 (or cover the full {T * C} columns) for TPU lane tiling.")

    # Cheap glue only: flat bias row and 2-D gamma/beta (no weight copies).
    b2 = b.reshape(1, T * C)
    gamma2 = gamma.reshape(1, C)
    beta2 = beta.reshape(1, C)

    kernel = functools.partial(
        _proj_ln_kernel, tokens_per_block=k, cross_attention_dim=C)

    # Advisory cost hint: this call is HBM-bound weight streaming.
    bytes_accessed = (_nbytes(w.shape, w.dtype)
                      + _nbytes(image_embeds.shape, image_embeds.dtype)
                      + _nbytes((B, T * C), image_embeds.dtype))
    cost = pl.CostEstimate(flops=2 * B * E * T * C,
                           transcendentals=0,
                           bytes_accessed=bytes_accessed)

    # Double-buffered tile footprint (pessimistic: x2 on everything).
    tile_bytes = 2 * (_nbytes((B, E), image_embeds.dtype)
                      + _nbytes((E, k * C), w.dtype)
                      + _nbytes((1, k * C), b.dtype)
                      + 2 * _nbytes((1, C), gamma.dtype)
                      + _nbytes((B, k * C), image_embeds.dtype))

    # Generation-aware scoped-VMEM handling: only raise the limit when the
    # footprint needs it, and cap well under the physical VMEM of the part
    # (64 MiB on v7x -> 40 MiB cap; 128 MiB on v5e/v6e -> 48 MiB cap).
    phys_vmem = _physical_vmem_bytes()
    default_scoped = (32 * 1024 * 1024 if phys_vmem <= 64 * 1024 * 1024
                      else 16 * 1024 * 1024)          # assume v5e worst case
    cp_kwargs = dict(dimension_semantics=("parallel",))
    if tile_bytes > (default_scoped * 3) // 4:
        cap = min(phys_vmem * 5 // 8, 48 * 1024 * 1024)
        cp_kwargs["vmem_limit_bytes"] = min(
            max(int(tile_bytes * 3 // 2), default_scoped), cap)

    # With a 1-step grid the second pipeline buffer for W would be dead VMEM
    # equal to the whole weight tile; drop it.
    w_spec_kwargs = {}
    if num_blocks == 1:
        w_spec_kwargs["pipeline_mode"] = pl.Buffered(1)
    w_spec = pl.BlockSpec((E, k * C), lambda t: (0, t), **w_spec_kwargs)

    out_flat = pl.pallas_call(
        kernel,
        out_shape=jax.ShapeDtypeStruct((B, T * C), image_embeds.dtype),
        grid_spec=pltpu.PrefetchScalarGridSpec(
            num_scalar_prefetch=0,
            grid=(num_blocks,),
            in_specs=[
                pl.BlockSpec((B, E), lambda t: (0, 0)),        # x, resident
                w_spec,                                        # W columns
                pl.BlockSpec((1, k * C), lambda t: (0, t)),    # bias columns
                pl.BlockSpec((1, C), lambda t: (0, 0)),        # gamma
                pl.BlockSpec((1, C), lambda t: (0, 0)),        # beta
            ],
            out_specs=pl.BlockSpec((B, k * C), lambda t: (0, t)),
        ),
        compiler_params=pltpu.CompilerParams(**cp_kwargs),
        cost_estimate=cost,
    )(image_embeds, w, b2, gamma2, beta2)

    # (B, T*C) -> (B, T, C): pure reshape, no data movement.
    return out_flat.reshape(B, T, C)


if __name__ == "__main__":
    # Small shapes consistent with the module's forward:
    B = 2                      # batch
    E = 128                    # clip_embeddings_dim
    C = 128                    # cross_attention_dim
    T = 4                      # clip_extra_context_tokens

    key = jax.random.PRNGKey(0)
    k_x, k_w, k_b = jax.random.split(key, 3)

    image_embeds = jax.random.normal(k_x, (B, E), dtype=jnp.float32)

    # Weights/bias are stored persistently in bf16 (half the HBM bytes to
    # stream); LayerNorm affine params stay f32.
    w = (0.02 * jax.random.normal(k_w, (E, T * C), dtype=jnp.float32)
         ).astype(jnp.bfloat16)
    b = (0.01 * jax.random.normal(k_b, (T * C,), dtype=jnp.float32)
         ).astype(jnp.bfloat16)
    gamma = jnp.ones((C,), dtype=jnp.float32)
    beta = jnp.zeros((C,), dtype=jnp.float32)

    out = image_proj_model(
        image_embeds, w, b, gamma, beta,
        clip_extra_context_tokens=T, cross_attention_dim=C)
    out = jax.block_until_ready(out)

    # Pure-JAX reference (Linear -> reshape -> LayerNorm) using the same
    # quantization the kernel sees (x cast to the bf16 weight dtype, W/bias
    # values exactly representable in bf16, f32 accumulation and LN math).
    xq = image_embeds.astype(w.dtype).astype(jnp.float32)
    wq = w.astype(jnp.float32)
    bq = b.astype(jnp.float32)
    y_ref = (xq @ wq + bq).reshape(B, T, C)
    mean = jnp.mean(y_ref, axis=-1, keepdims=True)
    var = jnp.mean((y_ref - mean) ** 2, axis=-1, keepdims=True)
    y_ref = (y_ref - mean) / jnp.sqrt(var + LN_EPS) * gamma + beta

    assert out.shape == (B, T, C)
    assert jnp.allclose(out, y_ref, atol=2e-4, rtol=2e-4)
    print("KERNEL_OK")
</pallas_src>

<mosaic_0001>
module attributes {stable_mosaic.version = 11 : i64} {
  func.func @_proj_ln_kernel(%arg0: i32, %arg1: memref<2x128xf32, #tpu.memory_space<vmem>>, %arg2: memref<128x256xbf16, #tpu.memory_space<vmem>>, %arg3: memref<1x256xbf16, #tpu.memory_space<vmem>>, %arg4: memref<1x128xf32, #tpu.memory_space<vmem>>, %arg5: memref<1x128xf32, #tpu.memory_space<vmem>>, %arg6: memref<2x256xf32, #tpu.memory_space<vmem>>) attributes {dimension_semantics = [#tpu.dimension_semantics<parallel>], iteration_bounds = array<i64: 2>, scalar_prefetch = 0 : i64, scratch_operands = 0 : i64, tpu.core_type = #tpu.core_type<tc>, window_params = [{pipeline_mode = #tpu.pipeline_mode<synchronous>, transform_indices = @transform_0, window_bounds = array<i64: 2, 128>}, {transform_indices = @transform_1, window_bounds = array<i64: 128, 256>}, {transform_indices = @transform_2, window_bounds = array<i64: 1, 256>}, {pipeline_mode = #tpu.pipeline_mode<synchronous>, transform_indices = @transform_3, window_bounds = array<i64: 1, 128>}, {pipeline_mode = #tpu.pipeline_mode<synchronous>, transform_indices = @transform_4, window_bounds = array<i64: 1, 128>}, {transform_indices = @transform_5, window_bounds = array<i64: 2, 256>}]} {
    %c0 = arith.constant 0 : index
    %c0_0 = arith.constant 0 : index
    %0 = vector.load %arg2[%c0, %c0_0] : memref<128x256xbf16, #tpu.memory_space<vmem>>, vector<128x256xbf16>
    %c0_1 = arith.constant 0 : index
    %c0_2 = arith.constant 0 : index
    %1 = vector.load %arg1[%c0_1, %c0_2] : memref<2x128xf32, #tpu.memory_space<vmem>>, vector<2x128xf32>
    %2 = arith.truncf %1 : vector<2x128xf32> to vector<2x128xbf16>
    %cst = arith.constant dense<0.000000e+00> : vector<2x256xf32>
    %3 = tpu.matmul %2, %0, %cst {dimension_numbers = #tpu.dot_dimension_numbers<[1], [0], [0], [1], [0, 0, 1, 1], [], []>} : vector<2x128xbf16>, vector<128x256xbf16>, vector<2x256xf32> -> vector<2x256xf32>
    %c0_3 = arith.constant 0 : index
    %c0_4 = arith.constant 0 : index
    %4 = vector.load %arg3[%c0_3, %c0_4] : memref<1x256xbf16, #tpu.memory_space<vmem>>, vector<1x256xbf16>
    %5 = arith.extf %4 : vector<1x256xbf16> to vector<1x256xf32>
    %6 = vector.broadcast %5 : vector<1x256xf32> to vector<2x256xf32>
    %7 = arith.addf %3, %6 : vector<2x256xf32>
    %c0_5 = arith.constant 0 : index
    %c0_6 = arith.constant 0 : index
    %8 = vector.load %arg4[%c0_5, %c0_6] : memref<1x128xf32, #tpu.memory_space<vmem>>, vector<1x128xf32>
    %c0_7 = arith.constant 0 : index
    %c0_8 = arith.constant 0 : index
    %9 = vector.load %arg5[%c0_7, %c0_8] : memref<1x128xf32, #tpu.memory_space<vmem>>, vector<1x128xf32>
    %10 = vector.extract_strided_slice %7 {offsets = [0, 0], sizes = [2, 128], strides = [1, 1]} : vector<2x256xf32> to vector<2x128xf32>
    %cst_9 = arith.constant dense<0.000000e+00> : vector<2xf32>
    %11 = vector.multi_reduction <add>, %10, %cst_9 [1] : vector<2x128xf32> to vector<2xf32>
    %12 = vector.shape_cast %11 : vector<2xf32> to vector<2x1xf32>
    %cst_10 = arith.constant 7.812500e-03 : f32
    %13 = vector.broadcast %cst_10 : f32 to vector<2x1xf32>
    %14 = arith.mulf %12, %13 : vector<2x1xf32>
    %15 = arith.mulf %10, %10 : vector<2x128xf32>
    %cst_11 = arith.constant dense<0.000000e+00> : vector<2xf32>
    %16 = vector.multi_reduction <add>, %15, %cst_11 [1] : vector<2x128xf32> to vector<2xf32>
    %17 = vector.shape_cast %16 : vector<2xf32> to vector<2x1xf32>
    %cst_12 = arith.constant 7.812500e-03 : f32
    %18 = vector.broadcast %cst_12 : f32 to vector<2x1xf32>
    %19 = arith.mulf %17, %18 : vector<2x1xf32>
    %20 = arith.mulf %14, %14 : vector<2x1xf32>
    %21 = arith.subf %19, %20 : vector<2x1xf32>
    %22 = vector.broadcast %14 : vector<2x1xf32> to vector<2x128xf32>
    %23 = arith.subf %10, %22 : vector<2x128xf32>
    %cst_13 = arith.constant 9.99999974E-6 : f32
    %24 = vector.broadcast %cst_13 : f32 to vector<2x1xf32>
    %25 = arith.addf %21, %24 : vector<2x1xf32>
    %26 = math.rsqrt %25 : vector<2x1xf32>
    %27 = vector.broadcast %26 : vector<2x1xf32> to vector<2x128xf32>
    %28 = arith.mulf %23, %27 : vector<2x128xf32>
    %29 = vector.broadcast %8 : vector<1x128xf32> to vector<2x128xf32>
    %30 = arith.mulf %28, %29 : vector<2x128xf32>
    %31 = vector.broadcast %9 : vector<1x128xf32> to vector<2x128xf32>
    %32 = arith.addf %30, %31 : vector<2x128xf32>
    %c0_14 = arith.constant 0 : index
    %c0_15 = arith.constant 0 : index
    %33 = vector.load %arg6[%c0_14, %c0_15] : memref<2x256xf32, #tpu.memory_space<vmem>>, vector<2x128xf32>
    tpu.vector_store %arg6[%c0_14, %c0_15], %32 {strides = array<i32>} : memref<2x256xf32, #tpu.memory_space<vmem>>, vector<2x128xf32>,
    %34 = vector.extract_strided_slice %7 {offsets = [0, 128], sizes = [2, 128], strides = [1, 1]} : vector<2x256xf32> to vector<2x128xf32>
    %cst_16 = arith.constant dense<0.000000e+00> : vector<2xf32>
    %35 = vector.multi_reduction <add>, %34, %cst_16 [1] : vector<2x128xf32> to vector<2xf32>
    %36 = vector.shape_cast %35 : vector<2xf32> to vector<2x1xf32>
    %cst_17 = arith.constant 7.812500e-03 : f32
    %37 = vector.broadcast %cst_17 : f32 to vector<2x1xf32>
    %38 = arith.mulf %36, %37 : vector<2x1xf32>
    %39 = arith.mulf %34, %34 : vector<2x128xf32>
    %cst_18 = arith.constant dense<0.000000e+00> : vector<2xf32>
    %40 = vector.multi_reduction <add>, %39, %cst_18 [1] : vector<2x128xf32> to vector<2xf32>
    %41 = vector.shape_cast %40 : vector<2xf32> to vector<2x1xf32>
    %cst_19 = arith.constant 7.812500e-03 : f32
    %42 = vector.broadcast %cst_19 : f32 to vector<2x1xf32>
    %43 = arith.mulf %41, %42 : vector<2x1xf32>
    %44 = arith.mulf %38, %38 : vector<2x1xf32>
    %45 = arith.subf %43, %44 : vector<2x1xf32>
    %46 = vector.broadcast %38 : vector<2x1xf32> to vector<2x128xf32>
    %47 = arith.subf %34, %46 : vector<2x128xf32>
    %cst_20 = arith.constant 9.99999974E-6 : f32
    %48 = vector.broadcast %cst_20 : f32 to vector<2x1xf32>
    %49 = arith.addf %45, %48 : vector<2x1xf32>
    %50 = math.rsqrt %49 : vector<2x1xf32>
    %51 = vector.broadcast %50 : vector<2x1xf32> to vector<2x128xf32>
    %52 = arith.mulf %47, %51 : vector<2x128xf32>
    %53 = vector.broadcast %8 : vector<1x128xf32> to vector<2x128xf32>
    %54 = arith.mulf %52, %53 : vector<2x128xf32>
    %55 = vector.broadcast %9 : vector<1x128xf32> to vector<2x128xf32>
    %56 = arith.addf %54, %55 : vector<2x128xf32>
    %c0_21 = arith.constant 0 : index
    %c128 = arith.constant 128 : index
    %57 = vector.load %arg6[%c0_21, %c128] : memref<2x256xf32, #tpu.memory_space<vmem>>, vector<2x128xf32>
    tpu.vector_store %arg6[%c0_21, %c128], %56 {strides = array<i32>} : memref<2x256xf32, #tpu.memory_space<vmem>>, vector<2x128xf32>,
    return
  }
  func.func @transform_0(%arg0: i32) -> (i32, i32) {
    %c0_i32 = arith.constant 0 : i32
    %c0_i32_0 = arith.constant 0 : i32
    %c0_i32_1 = arith.constant 0 : i32
    return %c0_i32, %c0_i32_0 : i32, i32
  }
  func.func @transform_1(%arg0: i32) -> (i32, i32) {
    %c0_i32 = arith.constant 0 : i32
    %c0_i32_0 = arith.constant 0 : i32
    return %c0_i32, %arg0 : i32, i32
  }
  func.func @transform_2(%arg0: i32) -> (i32, i32) {
    %c0_i32 = arith.constant 0 : i32
    %c0_i32_0 = arith.constant 0 : i32
    return %c0_i32, %arg0 : i32, i32
  }
  func.func @transform_3(%arg0: i32) -> (i32, i32) {
    %c0_i32 = arith.constant 0 : i32
    %c0_i32_0 = arith.constant 0 : i32
    %c0_i32_1 = arith.constant 0 : i32
    return %c0_i32, %c0_i32_0 : i32, i32
  }
  func.func @transform_4(%arg0: i32) -> (i32, i32) {
    %c0_i32 = arith.constant 0 : i32
    %c0_i32_0 = arith.constant 0 : i32
    %c0_i32_1 = arith.constant 0 : i32
    return %c0_i32, %c0_i32_0 : i32, i32
  }
  func.func @transform_5(%arg0: i32) -> (i32, i32) {
    %c0_i32 = arith.constant 0 : i32
    %c0_i32_0 = arith.constant 0 : i32
    return %c0_i32, %arg0 : i32, i32
  }
}

</mosaic_0001>

<llo_original>
// kernel: tpu_custom_call.1
$region0: #{tpu_custom_call.1}
  #allocation0 [shape = 'u32[]', space=smem, size = 0x4, offset = 0x4, fixed_abs, tag = 'smem constant byte address 0x4 - core index']
  #allocation1 [shape = 'u32[72,128]{1,0:T(1,128)}', space=vmem, size = 0x9000, scoped, tag = 'internal scratch']
  %s0 = inlined_call_operand.hbm [shape: f32[2,128], index: 0, kind: input, shape index: {}]
  %s1 = inlined_call_operand.hbm [shape: bf16[128,512], index: 1, kind: input, shape index: {}]
  %s2 = inlined_call_operand.hbm [shape: bf16[1,512], index: 2, kind: input, shape index: {}]
  %s3 = inlined_call_operand.vmem [shape: f32[1,128], index: 3, kind: input, shape index: {}]
  %s4 = inlined_call_operand.vmem [shape: f32[1,128], index: 4, kind: input, shape index: {}]
  %s5 = inlined_call_operand.hbm [shape: f32[2,512], index: 5, kind: output, shape index: {}]
  %s6 = sld [smem:[#allocation0]]
  $region65: #{tpu_custom_call.1} parent=0
    _
  %s8 = ssub.s32 1, %s6
  %s9 = scalar_select 0, %s8, %s6
  $region1: #{tpu_custom_call.1} parent=0
    #allocation2 [shape = 'u8[1024]{0}', space=vmem, size = 0x400, scoped, tag = 'input window, operand 0, single buffered']
    #allocation3 [shape = 's32[2]{0}', space=sflag, size = 0x8, scoped, tag = 'scoped memory for tpu_custom_call.1']
    #allocation4 [shape = 's32[2]{0}', space=sflag, size = 0x8, scoped, tag = 'scoped memory for tpu_custom_call.1']
    #allocation5 [shape = 'u8[131072]{0}', space=vmem, size = 0x20000, scoped, tag = 'input window, operand 1']
    #allocation6 [shape = 's32[2]{0}', space=sflag, size = 0x8, scoped, tag = 'scoped memory for tpu_custom_call.1']
    #allocation7 [shape = 'u8[2048]{0}', space=vmem, size = 0x800, scoped, tag = 'input window, operand 2']
    #allocation8 [shape = 'u8[4096]{0}', space=vmem, size = 0x1000, scoped, tag = 'output window, operand 0']
    %10 = vsyncpa [#allocation3], 0
    %11 = vsyncpa [#allocation6], 0
    %s12 = scalar_lea.sflag [#allocation6], 1
    %13 = vsyncpa %s12, 0
    %14 = vsyncpa [#allocation4], 0
    %s15 = scalar_lea.sflag [#allocation4], 1
    %16 = vsyncpa %s15, 0
    loop: start=0, step=1, limit=4
    $region2: #{tpu_custom_call.1} parent=1 // loop_pre_header
      _
    $region3: #{tpu_custom_call.1} parent=1 // loop_header
      %s18 = sphi 0, %s22
      %p19 = scmp.ge.s32.totalorder %s18, 4
      %s26 = sphi 0, %s26
      %s28 = sphi 0, %s26
      %s29 = sphi 0, %s28
      %s43 = sphi 0, %s29
      %s49 = sphi 0, %s51
      %s52 = sphi 0, %s49
      %s53 = sphi 0, %s52
      %s69 = sphi 0, %s53
      %s75 = sphi 0, %s77
      %s78 = sphi 0, %s75
      %s79 = sphi 0, %s78
      %s95 = sphi 0, %s79
      %s99 = sphi 0, %s99
      %s101 = sphi 0, %s99
      %s102 = sphi 0, %s101
      %s116 = sphi 0, %s102
      %s120 = sphi 0, %s120
      %s122 = sphi 0, %s120
      %s123 = sphi 0, %s122
      %s137 = sphi 0, %s123
      %s143 = sphi 0, %s145
      %s146 = sphi 0, %s143
      %s147 = sphi 0, %s146
      %s163 = sphi 0, %s147
    $region4: #{tpu_custom_call.1} parent=1 // loop_header_branch
      %21 = sbr.rel (%p19) target = $region8
    $region5: #{tpu_custom_call.1} parent=1 // loop_body
      %s23 = ssub.s32 %s18, 1
      %s24 = ssub.s32 %s18, 2
      %s25 = sadd.s32 %s18, 1
      %s27 = sadd.s32 %s26, 1
      %p30 = scmp.eq.s32.totalorder %s18, 1
      %p31 = scmp.ne.s32.totalorder %s26, %s28
      %p32 = scmp.eq.s32.totalorder %s18, 0
      %p33 = por %p31, %p32
      %p34 = scmp.ne.s32.totalorder %s26, %s28
      %p35 = scmp.eq.s32.totalorder %s23, 1
      %p36 = por %p34, %p35
      %p37 = scmp.ne.s32.totalorder %s28, %s29
      %p38 = scmp.eq.s32.totalorder %s23, 0
      %p39 = por %p37, %p38
      %p40 = scmp.ne.s32.totalorder %s28, %s29
      %p41 = scmp.eq.s32.totalorder %s24, 1
      %p42 = por %p40, %p41
      %p44 = scmp.ne.s32.totalorder %s29, %s43
      %p45 = scmp.eq.s32.totalorder %s24, 0
      %p46 = por %p44, %p45
      %s47 = ssub.s32 %s18, %s25
      %p48 = scmp.eq.s32.totalorder %s47, 0
      %s50 = sadd.s32 %s49, 1
      %s51 = scalar_select %p48, %s49, %s50
      %p54 = pneg %p48
      %p55 = scmp.eq.s32.totalorder %s18, 1
      %p56 = por %p54, %p55
      %p57 = scmp.ne.s32.totalorder %s49, %s52
      %p58 = scmp.eq.s32.totalorder %s18, 0
      %p59 = por %p57, %p58
      %p60 = scmp.ne.s32.totalorder %s49, %s52
      %p61 = scmp.eq.s32.totalorder %s23, 1
      %p62 = por %p60, %p61
      %p63 = scmp.ne.s32.totalorder %s52, %s53
      %p64 = scmp.eq.s32.totalorder %s23, 0
      %p65 = por %p63, %p64
      %p66 = scmp.ne.s32.totalorder %s52, %s53
      %p67 = scmp.eq.s32.totalorder %s24, 1
      %p68 = por %p66, %p67
      %p70 = scmp.ne.s32.totalorder %s53, %s69
      %p71 = scmp.eq.s32.totalorder %s24, 0
      %p72 = por %p70, %p71
      %s73 = ssub.s32 %s18, %s25
      %p74 = scmp.eq.s32.totalorder %s73, 0
      %s76 = sadd.s32 %s75, 1
      %s77 = scalar_select %p74, %s75, %s76
      %p80 = pneg %p74
      %p81 = scmp.eq.s32.totalorder %s18, 1
      %p82 = por %p80, %p81
      %p83 = scmp.ne.s32.totalorder %s75, %s78
      %p84 = scmp.eq.s32.totalorder %s18, 0
      %p85 = por %p83, %p84
      %p86 = scmp.ne.s32.totalorder %s75, %s78
      %p87 = scmp.eq.s32.totalorder %s23, 1
      %p88 = por %p86, %p87
      %p89 = scmp.ne.s32.totalorder %s78, %s79
      %p90 = scmp.eq.s32.totalorder %s23, 0
      %p91 = por %p89, %p90
      %p92 = scmp.ne.s32.totalorder %s78, %s79
      %p93 = scmp.eq.s32.totalorder %s24, 1
      %p94 = por %p92, %p93
      %p96 = scmp.ne.s32.totalorder %s79, %s95
      %p97 = scmp.eq.s32.totalorder %s24, 0
      %p98 = por %p96, %p97
      %s100 = sadd.s32 %s99, 1
      %p103 = scmp.eq.s32.totalorder %s18, 1
      %p104 = scmp.ne.s32.totalorder %s99, %s101
      %p105 = scmp.eq.s32.totalorder %s18, 0
      %p106 = por %p104, %p105
      %p107 = scmp.ne.s32.totalorder %s99, %s101
      %p108 = scmp.eq.s32.totalorder %s23, 1
      %p109 = por %p107, %p108
      %p110 = scmp.ne.s32.totalorder %s101, %s102
      %p111 = scmp.eq.s32.totalorder %s23, 0
      %p112 = por %p110, %p111
      %p113 = scmp.ne.s32.totalorder %s101, %s102
      %p114 = scmp.eq.s32.totalorder %s24, 1
      %p115 = por %p113, %p114
      %p117 = scmp.ne.s32.totalorder %s102, %s116
      %p118 = scmp.eq.s32.totalorder %s24, 0
      %p119 = por %p117, %p118
      %s121 = sadd.s32 %s120, 1
      %p124 = scmp.eq.s32.totalorder %s18, 1
      %p125 = scmp.ne.s32.totalorder %s120, %s122
      %p126 = scmp.eq.s32.totalorder %s18, 0
      %p127 = por %p125, %p126
      %p128 = scmp.ne.s32.totalorder %s120, %s122
      %p129 = scmp.eq.s32.totalorder %s23, 1
      %p130 = por %p128, %p129
      %p131 = scmp.ne.s32.totalorder %s122, %s123
      %p132 = scmp.eq.s32.totalorder %s23, 0
      %p133 = por %p131, %p132
      %p134 = scmp.ne.s32.totalorder %s122, %s123
      %p135 = scmp.eq.s32.totalorder %s24, 1
      %p136 = por %p134, %p135
      %p138 = scmp.ne.s32.totalorder %s123, %s137
      %p139 = scmp.eq.s32.totalorder %s24, 0
      %p140 = por %p138, %p139
      %s141 = ssub.s32 %s18, %s25
      %p142 = scmp.eq.s32.totalorder %s141, 0
      %s144 = sadd.s32 %s143, 1
      %s145 = scalar_select %p142, %s143, %s144
      %p148 = pneg %p142
      %p149 = scmp.eq.s32.totalorder %s18, 1
      %p150 = por %p148, %p149
      %p151 = scmp.ne.s32.totalorder %s143, %s146
      %p152 = scmp.eq.s32.totalorder %s18, 0
      %p153 = por %p151, %p152
      %p154 = scmp.ne.s32.totalorder %s143, %s146
      %p155 = scmp.eq.s32.totalorder %s23, 1
      %p156 = por %p154, %p155
      %p157 = scmp.ne.s32.totalorder %s146, %s147
      %p158 = scmp.eq.s32.totalorder %s23, 0
      %p159 = por %p157, %p158
      %p160 = scmp.ne.s32.totalorder %s146, %s147
      %p161 = scmp.eq.s32.totalorder %s24, 1
      %p162 = por %p160, %p161
      %p164 = scmp.ne.s32.totalorder %s147, %s163
      %p165 = scmp.eq.s32.totalorder %s24, 0
      %p166 = por %p164, %p165
      %p167 = scmp.le.s32.totalorder 1, %s18
      %p168 = scmp.lt.s32.totalorder %s18, 3
      %p169 = pnand %p167, %p168
      %p170 = pneg %p169
      // Predicated region
      $region9: #{tpu_custom_call.1} parent=5 // pred_check
        _
      $region10: #{tpu_custom_call.1} parent=5 // pred_check_branch
        %172 = sbr.rel (%p169) target = $region12
      $region11: #{tpu_custom_call.1} parent=5 // pred_region
        %s173 = ssub.s32 %s18, 1
        // Predicated region
        $region13: #{tpu_custom_call.1} parent=11 // pred_check
          %p174 = pneg %p39
        $region14: #{tpu_custom_call.1} parent=11 // pred_check_branch
          %176 = sbr.rel (%p174) target = $region16
        $region15: #{tpu_custom_call.1} parent=11 // pred_region
          %178 = vsyncadd [#allocation3], 0
          %s180 = sshll.u32 %s0, 4
          %s181 = int_to_ptr.hbm [resolvable:$true] %s180
          %s182 = sshll.u32 [#allocation2], 4
          %s183 = int_to_ptr.vmem [resolvable:$true] %s182
          %185 = dma.hbm_to_vmem [thread:$0]  %s181, 32, %s183, [#allocation3]
        $region16: #{tpu_custom_call.1} parent=11 // pred_fallthru
          _
        // Predicated region
        $region17: #{tpu_custom_call.1} parent=11 // pred_check
          %p186 = pneg %p112
        $region18: #{tpu_custom_call.1} parent=11 // pred_check_branch
          %188 = sbr.rel (%p186) target = $region20
        $region19: #{tpu_custom_call.1} parent=11 // pred_region
          _
        $region20: #{tpu_custom_call.1} parent=11 // pred_fallthru
          _
        // Predicated region
        $region21: #{tpu_custom_call.1} parent=11 // pred_check
          %p189 = pneg %p133
        $region22: #{tpu_custom_call.1} parent=11 // pred_check_branch
          %191 = sbr.rel (%p189) target = $region24
        $region23: #{tpu_custom_call.1} parent=11 // pred_region
          _
        $region24: #{tpu_custom_call.1} parent=11 // pred_fallthru
          _
      $region12: #{tpu_custom_call.1} parent=5 // pred_fallthru
        _
      %p192 = scmp.lt.s32.totalorder %s18, 2
      // Predicated region
      $region25: #{tpu_custom_call.1} parent=5 // pred_check
        %p193 = pneg %p192
      $region26: #{tpu_custom_call.1} parent=5 // pred_check_branch
        %195 = sbr.rel (%p193) target = $region28
      $region27: #{tpu_custom_call.1} parent=5 // pred_region
        // Predicated region
        $region29: #{tpu_custom_call.1} parent=27 // pred_check
          %p196 = pneg %p59
        $region30: #{tpu_custom_call.1} parent=27 // pred_check_branch
          %198 = sbr.rel (%p196) target = $region32
        $region31: #{tpu_custom_call.1} parent=27 // pred_region
          %s199 = sand.u32 %s18, 1
          %s200 = scalar_lea.sflag [#allocation6], %s199
          %s201 = sand.u32 %s49, 1
          %s202 = smul.addr %s201, 128
          %s203 = scalar_lea.vmem [#allocation5], %s202
          %s204 = smul.u32 2, %s18
          %206 = vsyncadd %s200, 0
          %s207 = smul.addr %s204, 4
          %s208 = scalar_lea.hbm %s1, %s207
          %s209 = sshll.u32 %s208, 4
          %s210 = int_to_ptr.hbm [resolvable:$true] %s209
          %s211 = sshll.u32 %s203, 4
          %s212 = int_to_ptr.vmem [resolvable:$true] %s211
          %217 = dma.hbm_to_vmem [thread:$0]  %s210, 2048, %s212, %s200, 256, 128, 8
        $region32: #{tpu_custom_call.1} parent=27 // pred_fallthru
          _
        // Predicated region
        $region33: #{tpu_custom_call.1} parent=27 // pred_check
          %p218 = pneg %p85
        $region34: #{tpu_custom_call.1} parent=27 // pred_check_branch
          %220 = sbr.rel (%p218) target = $region36
        $region35: #{tpu_custom_call.1} parent=27 // pred_region
          %s221 = sand.u32 %s18, 1
          %s222 = scalar_lea.sflag [#allocation6], %s221
          %s223 = sand.u32 %s75, 1
          %s224 = smul.addr %s223, 2
          %s225 = scalar_lea.vmem [#allocation7], %s224
          %s226 = smul.u32 2, %s18
          %228 = vsyncadd %s222, 0
          %s229 = scalar_lea.hbm %s2, %s226
          %s231 = sshll.u32 %s229, 4
          %s232 = int_to_ptr.hbm [resolvable:$true] %s231
          %s233 = sshll.u32 %s225, 4
          %s234 = int_to_ptr.vmem [resolvable:$true] %s233
          %236 = dma.hbm_to_vmem [thread:$0]  %s232, 32, %s234, %s222
        $region36: #{tpu_custom_call.1} parent=27 // pred_fallthru
          _
      $region28: #{tpu_custom_call.1} parent=5 // pred_fallthru
        _
      %p237 = scmp.le.s32.totalorder 1, %s18
      %p238 = scmp.lt.s32.totalorder %s18, 3
      %p239 = pnand %p237, %p238
      %p240 = pneg %p239
      // Predicated region
      $region37: #{tpu_custom_call.1} parent=5 // pred_check
        _
      $region38: #{tpu_custom_call.1} parent=5 // pred_check_branch
        %242 = sbr.rel (%p239) target = $region40
      $region39: #{tpu_custom_call.1} parent=5 // pred_region
        %s243 = ssub.s32 %s18, 1
        // Predicated region
        $region41: #{tpu_custom_call.1} parent=39 // pred_check
          %p244 = pneg %p39
        $region42: #{tpu_custom_call.1} parent=39 // pred_check_branch
          %246 = sbr.rel (%p244) target = $region44
        $region43: #{tpu_custom_call.1} parent=39 // pred_region
          %248 = dma.done [#allocation3], 32
        $region44: #{tpu_custom_call.1} parent=39 // pred_fallthru
          _
        %s249 = sand.u32 %s23, 1
        %s250 = scalar_lea.sflag [#allocation6], %s249
        %s251 = sand.u32 %s52, 1
        %s252 = smul.addr %s251, 128
        %s253 = scalar_lea.vmem [#allocation5], %s252
        // Predicated region
        $region45: #{tpu_custom_call.1} parent=39 // pred_check
          %p254 = pneg %p65
        $region46: #{tpu_custom_call.1} parent=39 // pred_check_branch
          %256 = sbr.rel (%p254) target = $region48
        $region47: #{tpu_custom_call.1} parent=39 // pred_region
          %258 = dma.done %s250, 2048
        $region48: #{tpu_custom_call.1} parent=39 // pred_fallthru
          _
        %s259 = sand.u32 %s23, 1
        %s260 = scalar_lea.sflag [#allocation6], %s259
        %s261 = sand.u32 %s78, 1
        %s262 = smul.addr %s261, 2
        %s263 = scalar_lea.vmem [#allocation7], %s262
        // Predicated region
        $region49: #{tpu_custom_call.1} parent=39 // pred_check
          %p264 = pneg %p91
        $region50: #{tpu_custom_call.1} parent=39 // pred_check_branch
          %266 = sbr.rel (%p264) target = $region52
        $region51: #{tpu_custom_call.1} parent=39 // pred_region
          %268 = dma.done %s260, 32
        $region52: #{tpu_custom_call.1} parent=39 // pred_fallthru
          _
        %p269 = pneg %p39
        %p270 = pneg %p36
        %s271 = sand.u32 %s23, 1
        %s272 = scalar_lea.sflag [#allocation6], %s271
        %s273 = sand.u32 %s52, 1
        %s274 = smul.addr %s273, 128
        %s275 = scalar_lea.vmem [#allocation5], %s274
        %p276 = pneg %p65
        %p277 = pneg %p62
        %s278 = sand.u32 %s23, 1
        %s279 = scalar_lea.sflag [#allocation6], %s278
        %s280 = sand.u32 %s78, 1
        %s281 = smul.addr %s280, 2
        %s282 = scalar_lea.vmem [#allocation7], %s281
        %p283 = pneg %p91
        %p284 = pneg %p88
        %p285 = pneg %p112
        %p286 = pneg %p109
        %p287 = pneg %p133
        %p288 = pneg %p130
        %p289 = pneg %p159
        %p290 = pneg %p156
        %s291 = sand.u32 %s146, 1
        %s292 = scalar_lea.sflag [#allocation4], %s291
        %s293 = sand.u32 %s146, 1
        %s294 = smul.addr %s293, 4
        %s295 = scalar_lea.vmem [#allocation8], %s294
        %s296 = smul.u32 2, %s23
        %s297 = smul.u32 2, %s23
        %s298 = smul.u32 2, %s23
        %v299 = vld [vmem:[%s253] sm:$0xff]
        %v300 = vld [vmem:[%s253 + $0x8] sm:$0xff]
        %v301 = vld [vmem:[%s253 + $0x10] sm:$0xff]
        %v302 = vld [vmem:[%s253 + $0x18] sm:$0xff]
        %v303 = vld [vmem:[%s253 + $0x20] sm:$0xff]
        %v304 = vld [vmem:[%s253 + $0x28] sm:$0xff]
        %v305 = vld [vmem:[%s253 + $0x30] sm:$0xff]
        %v306 = vld [vmem:[%s253 + $0x38] sm:$0xff]
        %v307 = vld [vmem:[%s253 + $0x40] sm:$0xff]
        %v308 = vld [vmem:[%s253 + $0x48] sm:$0xff]
        %v309 = vld [vmem:[%s253 + $0x50] sm:$0xff]
        %v310 = vld [vmem:[%s253 + $0x58] sm:$0xff]
        %v311 = vld [vmem:[%s253 + $0x60] sm:$0xff]
        %v312 = vld [vmem:[%s253 + $0x68] sm:$0xff]
        %v313 = vld [vmem:[%s253 + $0x70] sm:$0xff]
        %v314 = vld [vmem:[%s253 + $0x78] sm:$0xff]
        %v315 = vld [vmem:[#allocation2] sm:$0x3]
        %v316 = vpack.c.bf16 %v315, %v315
        %v317 = vld [vmem:[%s263] sm:$0x3]
        %v318 = vunpack.c.l.bf16 %v317
        %v320 = vperm.slane %v318, 0
        %v321 = vperm.slane %v318, 2
        %v324 = vperm.slane %v320, 0
        %v325 = vperm.slane %v321, 0
        %v342 = vunpack.c.l.b16 %v299
        %v343 = vunpack.c.h.b16 %v299
        %v344 = vunpack.c.l.b16 %v300
        %v345 = vunpack.c.h.b16 %v300
        %v346 = vunpack.c.l.b16 %v301
        %v347 = vunpack.c.h.b16 %v301
        %v348 = vunpack.c.l.b16 %v302
        %v349 = vunpack.c.h.b16 %v302
        %v350 = vunpack.c.l.b16 %v303
        %v351 = vunpack.c.h.b16 %v303
        %v352 = vunpack.c.l.b16 %v304
        %v353 = vunpack.c.h.b16 %v304
        %v354 = vunpack.c.l.b16 %v305
        %v355 = vunpack.c.h.b16 %v305
        %v356 = vunpack.c.l.b16 %v306
        %v357 = vunpack.c.h.b16 %v306
        %v358 = vunpack.c.l.b16 %v307
        %v359 = vunpack.c.h.b16 %v307
        %v360 = vunpack.c.l.b16 %v308
        %v361 = vunpack.c.h.b16 %v308
        %v362 = vunpack.c.l.b16 %v309
        %v363 = vunpack.c.h.b16 %v309
        %v364 = vunpack.c.l.b16 %v310
        %v365 = vunpack.c.h.b16 %v310
        %v366 = vunpack.c.l.b16 %v311
        %v367 = vunpack.c.h.b16 %v311
        %v368 = vunpack.c.l.b16 %v312
        %v369 = vunpack.c.h.b16 %v312
        %v370 = vunpack.c.l.b16 %v313
        %v371 = vunpack.c.h.b16 %v313
        %v372 = vunpack.c.l.b16 %v314
        %v373 = vunpack.c.h.b16 %v314
        %v374 = vpack.c.b16 %v344, %v342
        %v375 = vpack.c.b16 %v345, %v343
        %v376 = vpack.c.b16 %v348, %v346
        %v377 = vpack.c.b16 %v349, %v347
        %v378 = vpack.c.b16 %v352, %v350
        %v379 = vpack.c.b16 %v353, %v351
        %v380 = vpack.c.b16 %v356, %v354
        %v381 = vpack.c.b16 %v357, %v355
        %v382 = vpack.c.b16 %v360, %v358
        %v383 = vpack.c.b16 %v361, %v359
        %v384 = vpack.c.b16 %v364, %v362
        %v385 = vpack.c.b16 %v365, %v363
        %v386 = vpack.c.b16 %v368, %v366
        %v387 = vpack.c.b16 %v369, %v367
        %v388 = vpack.c.b16 %v372, %v370
        %v389 = vpack.c.b16 %v373, %v371
        %406 = vmatpush.bf16.msra.mxu0 %v388
        %407 = vmatpush.bf16.msra.mxu0 %v386
        %408 = vmatpush.bf16.msra.mxu0 %v384
        %409 = vmatpush.bf16.msra.mxu0 %v382
        %410 = vmatpush.bf16.msra.mxu0 %v380
        %411 = vmatpush.bf16.msra.mxu0 %v378
        %412 = vmatpush.bf16.msra.mxu0 %v376
        %413 = vmatpush.bf16.msra.mxu0 %v374
        %414 = vmatmul.bf16.gmra.mxu0 %v316
        %v415 = vpop.f32.mrf.mxu0
        %v416 = vadd.f32 %v324, %v415
        %v417 = vpop.f32.mrf.mxu0
        %418 = vdwg.mxu0
        %419 = vmatpush.bf16.msra.mxu0 %v389
        %420 = vmatpush.bf16.msra.mxu0 %v387
        %421 = vmatpush.bf16.msra.mxu0 %v385
        %422 = vmatpush.bf16.msra.mxu0 %v383
        %423 = vmatpush.bf16.msra.mxu0 %v381
        %424 = vmatpush.bf16.msra.mxu0 %v379
        %425 = vmatpush.bf16.msra.mxu0 %v377
        %426 = vmatpush.bf16.msra.mxu0 %v375
        %427 = vmatmul.bf16.gmra.mxu0 %v316
        %v428 = vpop.f32.mrf.mxu0
        %v429 = vadd.f32 %v325, %v428
        %v430 = vpop.f32.mrf.mxu0
        %431 = vdwg.mxu0
        %v432 = vld [vmem:[%s3] sm:$0x1]
        %v433 = vld [vmem:[%s4] sm:$0x1]
        %vm434 = vcmask 1041408
        %v435 = vsel %vm434, %v416, 0.0
        %436 = vadd.xlane.f32.xlu0 %v435
        %v437 = vpop.xlane.xlu0 %436
        %v438 = vmul.f32 %v437, 0.0078125
        %v439 = vmul.f32 %v416, %v416
        %v440 = vsel %vm434, %v439, 0.0
        %441 = vadd.xlane.f32.xlu0 %v440
        %v442 = vpop.xlane.xlu0 %441
        %v443 = vmul.f32 %v442, 0.0078125
        %v444 = vmul.f32 %v438, %v438
        %v445 = vsub.f32 %v443, %v444
        %v446 = vsub.f32 %v416, %v438
        %v447 = vadd.f32 %v445, 1e-05
        %v448 = vrsqrt.pop %v447
        %v449 = vmul.f32 %v448, %v447
        %v450 = vmul.f32 %v449, %v448
        %v451 = vmul.f32 0.5, %v450
        %v452 = vsub.f32 1.5, %v451
        %v453 = vmul.f32 %v448, %v452
        %vm454 = vweird.f32 %v447
        %vm455 = vweird.f32 %v448
        %vm456 = vmor %vm454, %vm455
        %v457 = vsel %vm456, %v448, %v453
        %v458 = vmul.f32 %v446, %v457
        %v460 = vperm.slane %v432, 0
        %v462 = vmul.f32 %v458, %v460
        %v464 = vperm.slane %v433, 0
        %v466 = vadd.f32 %v462, %v464
        %467 = vst [vmem:[%s295] sm:$0x3] %v466
        %v468 = vsel %vm434, %v429, 0.0
        %469 = vadd.xlane.f32.xlu0 %v468
        %v470 = vpop.xlane.xlu0 %469
        %v471 = vmul.f32 %v470, 0.0078125
        %v472 = vmul.f32 %v429, %v429
        %v473 = vsel %vm434, %v472, 0.0
        %474 = vadd.xlane.f32.xlu0 %v473
        %v475 = vpop.xlane.xlu0 %474
        %v476 = vmul.f32 %v475, 0.0078125
        %v477 = vmul.f32 %v471, %v471
        %v478 = vsub.f32 %v476, %v477
        %v479 = vsub.f32 %v429, %v471
        %v480 = vadd.f32 %v478, 1e-05
        %v481 = vrsqrt.pop %v480
        %v482 = vmul.f32 %v481, %v480
        %v483 = vmul.f32 %v482, %v481
        %v484 = vmul.f32 0.5, %v483
        %v485 = vsub.f32 1.5, %v484
        %v486 = vmul.f32 %v481, %v485
        %vm487 = vweird.f32 %v480
        %vm488 = vweird.f32 %v481
        %vm489 = vmor %vm487, %vm488
        %v490 = vsel %vm489, %v481, %v486
        %v491 = vmul.f32 %v479, %v490
        %v492 = vmul.f32 %v491, %v460
        %v493 = vadd.f32 %v492, %v464
        %494 = vst [vmem:[%s295 + $0x2] sm:$0x3] %v493
        %s495 = sand.u32 %s146, 1
        %s496 = scalar_lea.sflag [#allocation4], %s495
        %s497 = sand.u32 %s146, 1
        %s498 = smul.addr %s497, 4
        %s499 = scalar_lea.vmem [#allocation8], %s498
        // Predicated region
        $region53: #{tpu_custom_call.1} parent=39 // pred_check
          %p500 = pneg %p156
        $region54: #{tpu_custom_call.1} parent=39 // pred_check_branch
          %502 = sbr.rel (%p500) target = $region56
        $region55: #{tpu_custom_call.1} parent=39 // pred_region
          %s503 = smul.u32 2, %s23
          %505 = vsyncadd %s496, 0
          %s506 = smul.addr %s503, 2
          %s507 = scalar_lea.hbm %s5, %s506
          %s509 = sshll.u32 %s499, 4
          %s510 = int_to_ptr.vmem [resolvable:$true] %s509
          %s511 = sshll.u32 %s507, 4
          %s512 = int_to_ptr.hbm [resolvable:$true] %s511
          %514 = dma.vmem_to_hbm [thread:$0]  %s510, 64, %s512, %s496
        $region56: #{tpu_custom_call.1} parent=39 // pred_fallthru
          _
      $region40: #{tpu_custom_call.1} parent=5 // pred_fallthru
        _
      %p515 = scmp.le.s32.totalorder 2, %s18
      // Predicated region
      $region57: #{tpu_custom_call.1} parent=5 // pred_check
        %p516 = pneg %p515
      $region58: #{tpu_custom_call.1} parent=5 // pred_check_branch
        %518 = sbr.rel (%p516) target = $region60
      $region59: #{tpu_custom_call.1} parent=5 // pred_region
        %s519 = ssub.s32 %s18, 2
        // Predicated region
        $region61: #{tpu_custom_call.1} parent=59 // pred_check
          %p520 = pneg %p162
        $region62: #{tpu_custom_call.1} parent=59 // pred_check_branch
          %522 = sbr.rel (%p520) target = $region64
        $region63: #{tpu_custom_call.1} parent=59 // pred_region
          %s523 = sand.u32 %s147, 1
          %s524 = scalar_lea.sflag [#allocation4], %s523
          %s525 = sand.u32 %s147, 1
          %s526 = smul.addr %s525, 4
          %s527 = scalar_lea.vmem [#allocation8], %s526
          %529 = dma.done %s524, 64
        $region64: #{tpu_custom_call.1} parent=59 // pred_fallthru
          _
      $region60: #{tpu_custom_call.1} parent=5 // pred_fallthru
        _
    $region6: #{tpu_custom_call.1} parent=1 // loop_footer
      %s22 = sadd.s32 1, %s18
    $region7: #{tpu_custom_call.1} parent=1 // loop_footer_branch
      %17 = sbr.rel target = $region3
    $region8: #{tpu_custom_call.1} parent=1 // loop_exit
      _
    %530 = vsyncpa [#allocation3], 1
    %s531 = scalar_lea.sflag [#allocation3], 1
    %532 = vsyncpa %s531, 1
    %533 = vsyncpa [#allocation6], 1
    %s534 = scalar_lea.sflag [#allocation6], 1
    %535 = vsyncpa %s534, 1
    %536 = vsyncpa [#allocation4], 1
    %s537 = scalar_lea.sflag [#allocation4], 1
    %538 = vsyncpa %s537, 1

</llo_original>
